<compile_context>
chip_gen: v7x
topology: tpu7x:2x2x1
jax: 0.10.0
libtpu: 0.0.40
codegen_flags: <defaults>
</compile_context>

<pallas_src>
import functools

import jax
import jax.numpy as jnp
from jax import lax
from jax.experimental import pallas as pl
from jax.experimental.pallas import tpu as pltpu

_LANE = 128


def _pool_head_kernel(x_ref, w_ref, b_ref, o_ref, acc_ref, *, hw, ts, needs_mask):
    """Grid = (batch_tiles, spatial_tiles); the spatial axis is a reduction.

    x_ref  : (tb, C, ts)       tile of the NCHW-flattened activations
    w_ref  : (C, out_pad)      head weight^T, lane-padded, pre-scaled by 1/HW
    b_ref  : (1, out_pad)      head bias, lane-padded
    o_ref  : (tb, out_pad)     lane-dense logits slab
    acc_ref: (tb, C, cw) f32   lane-resident partial-sum accumulator
    """
    k = pl.program_id(1)

    @pl.when(k == 0)
    def _():
        acc_ref[...] = jnp.zeros_like(acc_ref)

    cw = acc_ref.shape[-1]          # min(ts, 128); ts % cw == 0 by construction
    n_chunks = ts // cw

    if needs_mask:
        lane = lax.broadcasted_iota(jnp.int32, (1, 1, cw), 2)
        base = k * ts

    # Inner loop: chunk-sized loads + VPU adds only (no per-step lane reduce).
    acc = acc_ref[...]
    for j in range(n_chunks):
        chunk = x_ref[:, :, j * cw:(j + 1) * cw].astype(jnp.float32)
        if needs_mask:
            # Zero out spatial positions past the true HW extent (tail tile).
            chunk = jnp.where(lane < hw - (base + j * cw), chunk, 0.0)
        acc = acc + chunk
    acc_ref[...] = acc

    @pl.when(k == pl.num_programs(1) - 1)
    def _():
        # Single cross-lane reduce + relayout, then the head matmul (1/HW is
        # already folded into w_ref).
        pooled = jnp.sum(acc_ref[...], axis=-1)                    # (tb, C)
        logits = jnp.dot(pooled, w_ref[...],
                         preferred_element_type=jnp.float32) + b_ref[...]
        o_ref[...] = logits.astype(o_ref.dtype)


def _vmem_budget_bytes():
    """~75% of physical VMEM: ~48 MiB on v7x, ~96 MiB on v5e/v6e."""
    cap = 64 * 1024 * 1024                     # v7x per-TC capacity (worst case)
    try:
        cap = int(getattr(pltpu.get_tpu_info(), "vmem_capacity_bytes", cap))
    except Exception:
        pass
    return (cap * 3) // 4


def _choose_tiles(B, C, HW, budget, itemsize):
    """Pick (tb, nb, ts, ns) so the double-buffered x tile fills — but fits —
    the per-generation VMEM budget."""
    reserve = 8 * 1024 * 1024                  # W/b/out/acc + compiler headroom
    per_buf = max((budget - reserve) // 2, 2 * 1024 * 1024)

    # --- spatial tile: full HW when small, else a large multiple of 128 -----
    tb_floor = B if B <= 8 else 8
    if HW <= _LANE:
        ts = HW                                # full extent (allowed, no mask)
    else:
        hw_floor = (HW // _LANE) * _LANE
        max_ts = per_buf // (tb_floor * C * itemsize)
        ts = max(_LANE, min(hw_floor, (max_ts // _LANE) * _LANE))
    ns = pl.cdiv(HW, ts)

    # --- batch tile: multiples of 8, grown to the budget ---------------------
    if B <= 8:
        tb = B
    else:
        max_tb = per_buf // (C * ts * itemsize)
        tb = max(8, (min(max_tb, B) // 8) * 8)
        # Keep >= 2 batch blocks so the "parallel" axis can span both v7x TCs.
        tb = min(tb, max(8, ((B // 2) // 8) * 8))
    nb = pl.cdiv(B, tb)
    return tb, nb, ts, ns


def multi_head_classifier_forward(x, head_idx, weight, bias):
    """Forward pass matching MultiHeadClassifier.forward (single-head branch).

    x        : (B, C, H, W) float32 (NCHW, like PyTorch) or (B, 1, C, H, W)
    head_idx : (B,) int32 -- with N_tasks == 1 all entries are 0
    weight   : (out_dim, in_ch) float32  (PyTorch nn.Linear layout)
    bias     : (out_dim,) float32
    """
    if x.ndim == 5 and x.shape[1] == 1:
        x = jnp.squeeze(x, axis=1)          # matches torch x.squeeze(1)
    del head_idx                            # N_tasks == 1 -> always head 0

    B, C, H, W = x.shape
    HW = H * W
    out_dim = weight.shape[0]
    inv_hw = 1.0 / HW

    # Free reshape only -- no materialized transpose pass over HBM.
    x_flat = x.reshape(B, C, HW)

    # Lane-dense padded head parameters; fold 1/HW into the weight so the
    # kernel accumulates raw sums only.
    out_pad = pl.cdiv(out_dim, _LANE) * _LANE
    w_pad = jnp.zeros((C, out_pad), jnp.float32).at[:, :out_dim].set(
        weight.T.astype(jnp.float32) * inv_hw)
    b_pad = jnp.zeros((1, out_pad), jnp.float32).at[0, :out_dim].set(
        bias.astype(jnp.float32))

    budget = _vmem_budget_bytes()
    itemsize = x_flat.dtype.itemsize
    tb, nb, ts, ns = _choose_tiles(B, C, HW, budget, itemsize)
    needs_mask = (HW % ts) != 0
    cw = min(ts, _LANE)

    kernel = functools.partial(_pool_head_kernel,
                               hw=HW, ts=ts, needs_mask=needs_mask)

    flops = B * C * HW + 2 * B * C * out_pad
    bytes_accessed = (x_flat.size * itemsize
                      + w_pad.size * 4 + b_pad.size * 4 + B * out_pad * 4)

    logits_padded = pl.pallas_call(
        kernel,
        out_shape=jax.ShapeDtypeStruct((B, out_pad), jnp.float32),
        grid_spec=pltpu.PrefetchScalarGridSpec(
            num_scalar_prefetch=0,
            grid=(nb, ns),
            in_specs=[
                pl.BlockSpec((tb, C, ts), lambda i, k: (i, 0, k)),
                pl.BlockSpec((C, out_pad), lambda i, k: (0, 0)),   # resident W
                pl.BlockSpec((1, out_pad), lambda i, k: (0, 0)),   # resident b
            ],
            out_specs=pl.BlockSpec((tb, out_pad), lambda i, k: (i, 0)),
            scratch_shapes=[pltpu.VMEM((tb, C, cw), jnp.float32)],
        ),
        compiler_params=pltpu.CompilerParams(
            dimension_semantics=("parallel", "arbitrary"),
            vmem_limit_bytes=int(budget),
        ),
        cost_estimate=pl.CostEstimate(
            flops=flops, transcendentals=0, bytes_accessed=bytes_accessed),
    )(x_flat, w_pad, b_pad)

    return logits_padded[:, :out_dim]


def _reference_forward(x, weight, bias):
    if x.ndim == 5 and x.shape[1] == 1:
        x = jnp.squeeze(x, axis=1)
    pooled = jnp.mean(x, axis=(2, 3))        # (B, C)
    return pooled @ weight.T + bias


if __name__ == "__main__":
    key = jax.random.PRNGKey(0)
    k_x, k_w, k_b, k_x2, k_x3, k_x4 = jax.random.split(key, 6)

    C, out_dim = 128, 10                      # module hardcodes in_ch = 128
    bound = 1.0 / (C ** 0.5)
    weight = jax.random.uniform(k_w, (out_dim, C), jnp.float32, -bound, bound)
    bias = jax.random.uniform(k_b, (out_dim,), jnp.float32, -bound, bound)

    # Case 1: small feature map (HW=64 -> single spatial grid step).
    B = 2
    head_idx = jnp.zeros((B,), dtype=jnp.int32)
    x1 = jax.random.normal(k_x, (B, C, 8, 8), dtype=jnp.float32)
    out1 = jax.block_until_ready(
        multi_head_classifier_forward(x1, head_idx, weight, bias))
    ref1 = _reference_forward(x1, weight, bias)
    assert out1.shape == (B, out_dim)
    assert jnp.allclose(out1, ref1, atol=1e-4, rtol=1e-4), "mismatch (8x8)"

    # Case 2: HW=256 -> 128-multiple spatial extent, no masking.
    x2 = jax.random.normal(k_x2, (B, C, 16, 16), dtype=jnp.float32)
    out2 = jax.block_until_ready(
        multi_head_classifier_forward(x2, head_idx, weight, bias))
    ref2 = _reference_forward(x2, weight, bias)
    assert out2.shape == (B, out_dim)
    assert jnp.allclose(out2, ref2, atol=1e-4, rtol=1e-4), "mismatch (16x16)"

    # Case 3: ragged HW=180 -> exercises the masked tail tile + 2-step reduction.
    x3 = jax.random.normal(k_x3, (B, C, 12, 15), dtype=jnp.float32)
    out3 = jax.block_until_ready(
        multi_head_classifier_forward(x3, head_idx, weight, bias))
    ref3 = _reference_forward(x3, weight, bias)
    assert out3.shape == (B, out_dim)
    assert jnp.allclose(out3, ref3, atol=1e-4, rtol=1e-4), "mismatch (12x15)"

    # Case 4: B=16 -> exercises batch tiling (2 parallel batch blocks).
    B4 = 16
    head_idx4 = jnp.zeros((B4,), dtype=jnp.int32)
    x4 = jax.random.normal(k_x4, (B4, C, 8, 8), dtype=jnp.float32)
    out4 = jax.block_until_ready(
        multi_head_classifier_forward(x4, head_idx4, weight, bias))
    ref4 = _reference_forward(x4, weight, bias)
    assert out4.shape == (B4, out_dim)
    assert jnp.allclose(out4, ref4, atol=1e-4, rtol=1e-4), "mismatch (B=16)"

    print("KERNEL_OK")
</pallas_src>

<mosaic_0001>
module attributes {stable_mosaic.version = 11 : i64} {
  func.func @_pool_head_kernel(%arg0: i32, %arg1: i32, %arg2: memref<2x128x64xf32, #tpu.memory_space<vmem>>, %arg3: memref<128x128xf32, #tpu.memory_space<vmem>>, %arg4: memref<1x128xf32, #tpu.memory_space<vmem>>, %arg5: memref<2x128xf32, #tpu.memory_space<vmem>>, %arg6: memref<2x128x64xf32, #tpu.memory_space<vmem>>) attributes {dimension_semantics = [#tpu.dimension_semantics<parallel>, #tpu.dimension_semantics<arbitrary>], iteration_bounds = array<i64: 1, 1>, scalar_prefetch = 0 : i64, scratch_operands = 1 : i64, tpu.core_type = #tpu.core_type<tc>, window_params = [{transform_indices = @transform_0, window_bounds = array<i64: 2, 128, 64>}, {pipeline_mode = #tpu.pipeline_mode<synchronous>, transform_indices = @transform_1, window_bounds = array<i64: 128, 128>}, {pipeline_mode = #tpu.pipeline_mode<synchronous>, transform_indices = @transform_2, window_bounds = array<i64: 1, 128>}, {transform_indices = @transform_3, window_bounds = array<i64: 2, 128>}]} {
    %c0_i32 = arith.constant 0 : i32
    %0 = arith.cmpi eq, %arg1, %c0_i32 : i32
    %1 = arith.extui %0 : i1 to i32
    %c0_i32_0 = arith.constant 0 : i32
    %2 = arith.cmpi ne, %1, %c0_i32_0 : i32
    scf.if %2 {
      %cst = arith.constant 0.000000e+00 : f32
      %10 = vector.broadcast %cst : f32 to vector<2x128x64xf32>
      %c0_11 = arith.constant 0 : index
      %c0_12 = arith.constant 0 : index
      %c0_13 = arith.constant 0 : index
      %11 = vector.load %arg6[%c0_11, %c0_12, %c0_13] : memref<2x128x64xf32, #tpu.memory_space<vmem>>, vector<2x128x64xf32>
      tpu.vector_store %arg6[%c0_11, %c0_12, %c0_13], %10 {strides = array<i32>} : memref<2x128x64xf32, #tpu.memory_space<vmem>>, vector<2x128x64xf32>,
    } else {
    }
    %c0 = arith.constant 0 : index
    %c0_1 = arith.constant 0 : index
    %c0_2 = arith.constant 0 : index
    %3 = vector.load %arg6[%c0, %c0_1, %c0_2] : memref<2x128x64xf32, #tpu.memory_space<vmem>>, vector<2x128x64xf32>
    %c0_3 = arith.constant 0 : index
    %c0_4 = arith.constant 0 : index
    %c0_5 = arith.constant 0 : index
    %4 = vector.load %arg2[%c0_3, %c0_4, %c0_5] : memref<2x128x64xf32, #tpu.memory_space<vmem>>, vector<2x128x64xf32>
    %5 = arith.addf %3, %4 : vector<2x128x64xf32>
    %c0_6 = arith.constant 0 : index
    %c0_7 = arith.constant 0 : index
    %c0_8 = arith.constant 0 : index
    %6 = vector.load %arg6[%c0_6, %c0_7, %c0_8] : memref<2x128x64xf32, #tpu.memory_space<vmem>>, vector<2x128x64xf32>
    tpu.vector_store %arg6[%c0_6, %c0_7, %c0_8], %5 {strides = array<i32>} : memref<2x128x64xf32, #tpu.memory_space<vmem>>, vector<2x128x64xf32>,
    %c0_i32_9 = arith.constant 0 : i32
    %7 = arith.cmpi eq, %arg1, %c0_i32_9 : i32
    %8 = arith.extui %7 : i1 to i32
    %c0_i32_10 = arith.constant 0 : i32
    %9 = arith.cmpi ne, %8, %c0_i32_10 : i32
    scf.if %9 {
      %c0_11 = arith.constant 0 : index
      %c0_12 = arith.constant 0 : index
      %c0_13 = arith.constant 0 : index
      %10 = vector.load %arg6[%c0_11, %c0_12, %c0_13] : memref<2x128x64xf32, #tpu.memory_space<vmem>>, vector<2x128x64xf32>
      %cst = arith.constant dense<0.000000e+00> : vector<2x128xf32>
      %11 = vector.multi_reduction <add>, %10, %cst [2] : vector<2x128x64xf32> to vector<2x128xf32>
      %c0_14 = arith.constant 0 : index
      %c0_15 = arith.constant 0 : index
      %12 = vector.load %arg3[%c0_14, %c0_15] : memref<128x128xf32, #tpu.memory_space<vmem>>, vector<128x128xf32>
      %cst_16 = arith.constant dense<0.000000e+00> : vector<2x128xf32>
      %13 = tpu.matmul %11, %12, %cst_16 {dimension_numbers = #tpu.dot_dimension_numbers<[1], [0], [0], [1], [0, 0, 1, 1], [], []>} : vector<2x128xf32>, vector<128x128xf32>, vector<2x128xf32> -> vector<2x128xf32>
      %c0_17 = arith.constant 0 : index
      %c0_18 = arith.constant 0 : index
      %14 = vector.load %arg4[%c0_17, %c0_18] : memref<1x128xf32, #tpu.memory_space<vmem>>, vector<1x128xf32>
      %15 = vector.broadcast %14 : vector<1x128xf32> to vector<2x128xf32>
      %16 = arith.addf %13, %15 : vector<2x128xf32>
      %c0_19 = arith.constant 0 : index
      %c0_20 = arith.constant 0 : index
      %17 = vector.load %arg5[%c0_19, %c0_20] : memref<2x128xf32, #tpu.memory_space<vmem>>, vector<2x128xf32>
      tpu.vector_store %arg5[%c0_19, %c0_20], %16 {strides = array<i32>} : memref<2x128xf32, #tpu.memory_space<vmem>>, vector<2x128xf32>,
    } else {
    }
    return
  }
  func.func @transform_0(%arg0: i32, %arg1: i32) -> (i32, i32, i32) {
    %c0_i32 = arith.constant 0 : i32
    %c0_i32_0 = arith.constant 0 : i32
    return %arg0, %c0_i32, %arg1 : i32, i32, i32
  }
  func.func @transform_1(%arg0: i32, %arg1: i32) -> (i32, i32) {
    %c0_i32 = arith.constant 0 : i32
    %c0_i32_0 = arith.constant 0 : i32
    %c0_i32_1 = arith.constant 0 : i32
    return %c0_i32, %c0_i32_0 : i32, i32
  }
  func.func @transform_2(%arg0: i32, %arg1: i32) -> (i32, i32) {
    %c0_i32 = arith.constant 0 : i32
    %c0_i32_0 = arith.constant 0 : i32
    %c0_i32_1 = arith.constant 0 : i32
    return %c0_i32, %c0_i32_0 : i32, i32
  }
  func.func @transform_3(%arg0: i32, %arg1: i32) -> (i32, i32) {
    %c0_i32 = arith.constant 0 : i32
    %c0_i32_0 = arith.constant 0 : i32
    return %arg0, %c0_i32 : i32, i32
  }
}

</mosaic_0001>

<llo_original>
// kernel: tpu_custom_call.1
$region0: #{tpu_custom_call.1}
  #allocation0 [shape = 'u32[]', space=smem, size = 0x4, offset = 0x4, fixed_abs, tag = 'smem constant byte address 0x4 - core index']
  #allocation1 [shape = 'u32[144,128]{1,0:T(1,128)}', space=vmem, size = 0x12000, scoped, tag = 'internal scratch']
  #allocation2 [shape = 'f32[2,128,64]{2,1,0:T(8,128)}', space=vmem, size = 0x20000, scoped, tag = 'scratch operand']
  %s0 = inlined_call_operand.vmem [shape: f32[2,128,64], index: 0, kind: input, shape index: {}]
  %s1 = inlined_call_operand.vmem [shape: f32[128,128], index: 1, kind: input, shape index: {}]
  %s2 = inlined_call_operand.vmem [shape: f32[1,128], index: 2, kind: input, shape index: {}]
  %s3 = inlined_call_operand.hbm [shape: f32[2,128], index: 3, kind: output, shape index: {}]
  %s4 = sld [smem:[#allocation0]]
  $region30: #{tpu_custom_call.1} parent=0
    _
  %s6 = ssub.s32 1, %s4
  %s7 = scalar_select 0, %s6, %s4
  $region1: #{tpu_custom_call.1} parent=0
    #allocation3 [shape = 'u8[1024]{0}', space=vmem, size = 0x400, scoped, tag = 'output window, operand 0, single buffered']
    #allocation4 [shape = 's32[1]{0}', space=sflag, size = 0x4, scoped, tag = 'scoped memory for tpu_custom_call.1']
    %8 = vsyncpa [#allocation4], 0
    // Predicated region
    $region2: #{tpu_custom_call.1} parent=1 // pred_check
      _
    $region3: #{tpu_custom_call.1} parent=1 // pred_check_branch
      %10 = sbr.rel (0) target = $region5
    $region4: #{tpu_custom_call.1} parent=1 // pred_region
      _
    $region5: #{tpu_custom_call.1} parent=1 // pred_fallthru
      _
    // Predicated region
    $region6: #{tpu_custom_call.1} parent=1 // pred_check
      _
    $region7: #{tpu_custom_call.1} parent=1 // pred_check_branch
      %12 = sbr.rel (0) target = $region9
    $region8: #{tpu_custom_call.1} parent=1 // pred_region
      _
    $region9: #{tpu_custom_call.1} parent=1 // pred_fallthru
      _
    // Predicated region
    $region10: #{tpu_custom_call.1} parent=1 // pred_check
      _
    $region11: #{tpu_custom_call.1} parent=1 // pred_check_branch
      %14 = sbr.rel (0) target = $region13
    $region12: #{tpu_custom_call.1} parent=1 // pred_region
      _
    $region13: #{tpu_custom_call.1} parent=1 // pred_fallthru
      _
    %p15 = scmp.eq.s32.totalorder 0, 0
    // Predicated region
    $region14: #{tpu_custom_call.1} parent=1 // pred_check
      %p16 = pneg %p15
    $region15: #{tpu_custom_call.1} parent=1 // pred_check_branch
      %18 = sbr.rel (%p16) target = $region17
    $region16: #{tpu_custom_call.1} parent=1 // pred_region
      %vm19 = vcmask 523264
      %20 = vst.msk [vmem:[#allocation2] sm:$0xff] %vm19, 0.0
      %21 = vst.msk [vmem:[#allocation2 + $0x8] sm:$0xff] %vm19, 0.0
      %22 = vst.msk [vmem:[#allocation2 + $0x10] sm:$0xff] %vm19, 0.0
      %23 = vst.msk [vmem:[#allocation2 + $0x18] sm:$0xff] %vm19, 0.0
      %24 = vst.msk [vmem:[#allocation2 + $0x20] sm:$0xff] %vm19, 0.0
      %25 = vst.msk [vmem:[#allocation2 + $0x28] sm:$0xff] %vm19, 0.0
      %26 = vst.msk [vmem:[#allocation2 + $0x30] sm:$0xff] %vm19, 0.0
      %27 = vst.msk [vmem:[#allocation2 + $0x38] sm:$0xff] %vm19, 0.0
      %28 = vst.msk [vmem:[#allocation2 + $0x40] sm:$0xff] %vm19, 0.0
      %29 = vst.msk [vmem:[#allocation2 + $0x48] sm:$0xff] %vm19, 0.0
      %30 = vst.msk [vmem:[#allocation2 + $0x50] sm:$0xff] %vm19, 0.0
      %31 = vst.msk [vmem:[#allocation2 + $0x58] sm:$0xff] %vm19, 0.0
      %32 = vst.msk [vmem:[#allocation2 + $0x60] sm:$0xff] %vm19, 0.0
      %33 = vst.msk [vmem:[#allocation2 + $0x68] sm:$0xff] %vm19, 0.0
      %34 = vst.msk [vmem:[#allocation2 + $0x70] sm:$0xff] %vm19, 0.0
      %35 = vst.msk [vmem:[#allocation2 + $0x78] sm:$0xff] %vm19, 0.0
      %36 = vst.msk [vmem:[#allocation2 + $0x80] sm:$0xff] %vm19, 0.0
      %37 = vst.msk [vmem:[#allocation2 + $0x88] sm:$0xff] %vm19, 0.0
      %38 = vst.msk [vmem:[#allocation2 + $0x90] sm:$0xff] %vm19, 0.0
      %39 = vst.msk [vmem:[#allocation2 + $0x98] sm:$0xff] %vm19, 0.0
      %40 = vst.msk [vmem:[#allocation2 + $0xa0] sm:$0xff] %vm19, 0.0
      %41 = vst.msk [vmem:[#allocation2 + $0xa8] sm:$0xff] %vm19, 0.0
      %42 = vst.msk [vmem:[#allocation2 + $0xb0] sm:$0xff] %vm19, 0.0
      %43 = vst.msk [vmem:[#allocation2 + $0xb8] sm:$0xff] %vm19, 0.0
      %44 = vst.msk [vmem:[#allocation2 + $0xc0] sm:$0xff] %vm19, 0.0
      %45 = vst.msk [vmem:[#allocation2 + $0xc8] sm:$0xff] %vm19, 0.0
      %46 = vst.msk [vmem:[#allocation2 + $0xd0] sm:$0xff] %vm19, 0.0
      %47 = vst.msk [vmem:[#allocation2 + $0xd8] sm:$0xff] %vm19, 0.0
      %48 = vst.msk [vmem:[#allocation2 + $0xe0] sm:$0xff] %vm19, 0.0
      %49 = vst.msk [vmem:[#allocation2 + $0xe8] sm:$0xff] %vm19, 0.0
      %50 = vst.msk [vmem:[#allocation2 + $0xf0] sm:$0xff] %vm19, 0.0
      %51 = vst.msk [vmem:[#allocation2 + $0xf8] sm:$0xff] %vm19, 0.0
    $region17: #{tpu_custom_call.1} parent=1 // pred_fallthru
      _
    %v52 = vld [vmem:[#allocation2] sm:$0xff]
    %v53 = vld [vmem:[#allocation2 + $0x8] sm:$0xff]
    %v54 = vld [vmem:[#allocation2 + $0x10] sm:$0xff]
    %v55 = vld [vmem:[#allocation2 + $0x18] sm:$0xff]
    %v56 = vld [vmem:[#allocation2 + $0x20] sm:$0xff]
    %v57 = vld [vmem:[#allocation2 + $0x28] sm:$0xff]
    %v58 = vld [vmem:[#allocation2 + $0x30] sm:$0xff]
    %v59 = vld [vmem:[#allocation2 + $0x38] sm:$0xff]
    %v60 = vld [vmem:[#allocation2 + $0x40] sm:$0xff]
    %v61 = vld [vmem:[#allocation2 + $0x48] sm:$0xff]
    %v62 = vld [vmem:[#allocation2 + $0x50] sm:$0xff]
    %v63 = vld [vmem:[#allocation2 + $0x58] sm:$0xff]
    %v64 = vld [vmem:[#allocation2 + $0x60] sm:$0xff]
    %v65 = vld [vmem:[#allocation2 + $0x68] sm:$0xff]
    %v66 = vld [vmem:[#allocation2 + $0x70] sm:$0xff]
    %v67 = vld [vmem:[#allocation2 + $0x78] sm:$0xff]
    %v68 = vld [vmem:[#allocation2 + $0x80] sm:$0xff]
    %v69 = vld [vmem:[#allocation2 + $0x88] sm:$0xff]
    %v70 = vld [vmem:[#allocation2 + $0x90] sm:$0xff]
    %v71 = vld [vmem:[#allocation2 + $0x98] sm:$0xff]
    %v72 = vld [vmem:[#allocation2 + $0xa0] sm:$0xff]
    %v73 = vld [vmem:[#allocation2 + $0xa8] sm:$0xff]
    %v74 = vld [vmem:[#allocation2 + $0xb0] sm:$0xff]
    %v75 = vld [vmem:[#allocation2 + $0xb8] sm:$0xff]
    %v76 = vld [vmem:[#allocation2 + $0xc0] sm:$0xff]
    %v77 = vld [vmem:[#allocation2 + $0xc8] sm:$0xff]
    %v78 = vld [vmem:[#allocation2 + $0xd0] sm:$0xff]
    %v79 = vld [vmem:[#allocation2 + $0xd8] sm:$0xff]
    %v80 = vld [vmem:[#allocation2 + $0xe0] sm:$0xff]
    %v81 = vld [vmem:[#allocation2 + $0xe8] sm:$0xff]
    %v82 = vld [vmem:[#allocation2 + $0xf0] sm:$0xff]
    %v83 = vld [vmem:[#allocation2 + $0xf8] sm:$0xff]
    %v84 = vld [vmem:[%s0] sm:$0xff]
    %v85 = vld [vmem:[%s0 + $0x8] sm:$0xff]
    %v86 = vld [vmem:[%s0 + $0x10] sm:$0xff]
    %v87 = vld [vmem:[%s0 + $0x18] sm:$0xff]
    %v88 = vld [vmem:[%s0 + $0x20] sm:$0xff]
    %v89 = vld [vmem:[%s0 + $0x28] sm:$0xff]
    %v90 = vld [vmem:[%s0 + $0x30] sm:$0xff]
    %v91 = vld [vmem:[%s0 + $0x38] sm:$0xff]
    %v92 = vld [vmem:[%s0 + $0x40] sm:$0xff]
    %v93 = vld [vmem:[%s0 + $0x48] sm:$0xff]
    %v94 = vld [vmem:[%s0 + $0x50] sm:$0xff]
    %v95 = vld [vmem:[%s0 + $0x58] sm:$0xff]
    %v96 = vld [vmem:[%s0 + $0x60] sm:$0xff]
    %v97 = vld [vmem:[%s0 + $0x68] sm:$0xff]
    %v98 = vld [vmem:[%s0 + $0x70] sm:$0xff]
    %v99 = vld [vmem:[%s0 + $0x78] sm:$0xff]
    %v100 = vld [vmem:[%s0 + $0x80] sm:$0xff]
    %v101 = vld [vmem:[%s0 + $0x88] sm:$0xff]
    %v102 = vld [vmem:[%s0 + $0x90] sm:$0xff]
    %v103 = vld [vmem:[%s0 + $0x98] sm:$0xff]
    %v104 = vld [vmem:[%s0 + $0xa0] sm:$0xff]
    %v105 = vld [vmem:[%s0 + $0xa8] sm:$0xff]
    %v106 = vld [vmem:[%s0 + $0xb0] sm:$0xff]
    %v107 = vld [vmem:[%s0 + $0xb8] sm:$0xff]
    %v108 = vld [vmem:[%s0 + $0xc0] sm:$0xff]
    %v109 = vld [vmem:[%s0 + $0xc8] sm:$0xff]
    %v110 = vld [vmem:[%s0 + $0xd0] sm:$0xff]
    %v111 = vld [vmem:[%s0 + $0xd8] sm:$0xff]
    %v112 = vld [vmem:[%s0 + $0xe0] sm:$0xff]
    %v113 = vld [vmem:[%s0 + $0xe8] sm:$0xff]
    %v114 = vld [vmem:[%s0 + $0xf0] sm:$0xff]
    %v115 = vld [vmem:[%s0 + $0xf8] sm:$0xff]
    %v116 = vadd.f32 %v52, %v84
    %v117 = vadd.f32 %v53, %v85
    %v118 = vadd.f32 %v54, %v86
    %v119 = vadd.f32 %v55, %v87
    %v120 = vadd.f32 %v56, %v88
    %v121 = vadd.f32 %v57, %v89
    %v122 = vadd.f32 %v58, %v90
    %v123 = vadd.f32 %v59, %v91
    %v124 = vadd.f32 %v60, %v92
    %v125 = vadd.f32 %v61, %v93
    %v126 = vadd.f32 %v62, %v94
    %v127 = vadd.f32 %v63, %v95
    %v128 = vadd.f32 %v64, %v96
    %v129 = vadd.f32 %v65, %v97
    %v130 = vadd.f32 %v66, %v98
    %v131 = vadd.f32 %v67, %v99
    %v132 = vadd.f32 %v68, %v100
    %v133 = vadd.f32 %v69, %v101
    %v134 = vadd.f32 %v70, %v102
    %v135 = vadd.f32 %v71, %v103
    %v136 = vadd.f32 %v72, %v104
    %v137 = vadd.f32 %v73, %v105
    %v138 = vadd.f32 %v74, %v106
    %v139 = vadd.f32 %v75, %v107
    %v140 = vadd.f32 %v76, %v108
    %v141 = vadd.f32 %v77, %v109
    %v142 = vadd.f32 %v78, %v110
    %v143 = vadd.f32 %v79, %v111
    %v144 = vadd.f32 %v80, %v112
    %v145 = vadd.f32 %v81, %v113
    %v146 = vadd.f32 %v82, %v114
    %v147 = vadd.f32 %v83, %v115
    %vm148 = vcmask 523264
    %149 = vst.msk [vmem:[#allocation2] sm:$0xff] %vm148, %v116
    %150 = vst.msk [vmem:[#allocation2 + $0x8] sm:$0xff] %vm148, %v117
    %151 = vst.msk [vmem:[#allocation2 + $0x10] sm:$0xff] %vm148, %v118
    %152 = vst.msk [vmem:[#allocation2 + $0x18] sm:$0xff] %vm148, %v119
    %153 = vst.msk [vmem:[#allocation2 + $0x20] sm:$0xff] %vm148, %v120
    %154 = vst.msk [vmem:[#allocation2 + $0x28] sm:$0xff] %vm148, %v121
    %155 = vst.msk [vmem:[#allocation2 + $0x30] sm:$0xff] %vm148, %v122
    %156 = vst.msk [vmem:[#allocation2 + $0x38] sm:$0xff] %vm148, %v123
    %157 = vst.msk [vmem:[#allocation2 + $0x40] sm:$0xff] %vm148, %v124
    %158 = vst.msk [vmem:[#allocation2 + $0x48] sm:$0xff] %vm148, %v125
    %159 = vst.msk [vmem:[#allocation2 + $0x50] sm:$0xff] %vm148, %v126
    %160 = vst.msk [vmem:[#allocation2 + $0x58] sm:$0xff] %vm148, %v127
    %161 = vst.msk [vmem:[#allocation2 + $0x60] sm:$0xff] %vm148, %v128
    %162 = vst.msk [vmem:[#allocation2 + $0x68] sm:$0xff] %vm148, %v129
    %163 = vst.msk [vmem:[#allocation2 + $0x70] sm:$0xff] %vm148, %v130
    %164 = vst.msk [vmem:[#allocation2 + $0x78] sm:$0xff] %vm148, %v131
    %165 = vst.msk [vmem:[#allocation2 + $0x80] sm:$0xff] %vm148, %v132
    %166 = vst.msk [vmem:[#allocation2 + $0x88] sm:$0xff] %vm148, %v133
    %167 = vst.msk [vmem:[#allocation2 + $0x90] sm:$0xff] %vm148, %v134
    %168 = vst.msk [vmem:[#allocation2 + $0x98] sm:$0xff] %vm148, %v135
    %169 = vst.msk [vmem:[#allocation2 + $0xa0] sm:$0xff] %vm148, %v136
    %170 = vst.msk [vmem:[#allocation2 + $0xa8] sm:$0xff] %vm148, %v137
    %171 = vst.msk [vmem:[#allocation2 + $0xb0] sm:$0xff] %vm148, %v138
    %172 = vst.msk [vmem:[#allocation2 + $0xb8] sm:$0xff] %vm148, %v139
    %173 = vst.msk [vmem:[#allocation2 + $0xc0] sm:$0xff] %vm148, %v140
    %174 = vst.msk [vmem:[#allocation2 + $0xc8] sm:$0xff] %vm148, %v141
    %175 = vst.msk [vmem:[#allocation2 + $0xd0] sm:$0xff] %vm148, %v142
    %176 = vst.msk [vmem:[#allocation2 + $0xd8] sm:$0xff] %vm148, %v143
    %177 = vst.msk [vmem:[#allocation2 + $0xe0] sm:$0xff] %vm148, %v144
    %178 = vst.msk [vmem:[#allocation2 + $0xe8] sm:$0xff] %vm148, %v145
    %179 = vst.msk [vmem:[#allocation2 + $0xf0] sm:$0xff] %vm148, %v146
    %180 = vst.msk [vmem:[#allocation2 + $0xf8] sm:$0xff] %vm148, %v147
    // Predicated region
    $region18: #{tpu_custom_call.1} parent=1 // pred_check
      %p181 = pneg %p15
    $region19: #{tpu_custom_call.1} parent=1 // pred_check_branch
      %183 = sbr.rel (%p181) target = $region21
    $region20: #{tpu_custom_call.1} parent=1 // pred_region
      %v184 = vld [vmem:[#allocation2] sm:$0xff]
      %v185 = vld [vmem:[#allocation2 + $0x8] sm:$0xff]
      %v186 = vld [vmem:[#allocation2 + $0x10] sm:$0xff]
      %v187 = vld [vmem:[#allocation2 + $0x18] sm:$0xff]
      %v188 = vld [vmem:[#allocation2 + $0x20] sm:$0xff]
      %v189 = vld [vmem:[#allocation2 + $0x28] sm:$0xff]
      %v190 = vld [vmem:[#allocation2 + $0x30] sm:$0xff]
      %v191 = vld [vmem:[#allocation2 + $0x38] sm:$0xff]
      %v192 = vld [vmem:[#allocation2 + $0x40] sm:$0xff]
      %v193 = vld [vmem:[#allocation2 + $0x48] sm:$0xff]
      %v194 = vld [vmem:[#allocation2 + $0x50] sm:$0xff]
      %v195 = vld [vmem:[#allocation2 + $0x58] sm:$0xff]
      %v196 = vld [vmem:[#allocation2 + $0x60] sm:$0xff]
      %v197 = vld [vmem:[#allocation2 + $0x68] sm:$0xff]
      %v198 = vld [vmem:[#allocation2 + $0x70] sm:$0xff]
      %v199 = vld [vmem:[#allocation2 + $0x78] sm:$0xff]
      %v200 = vld [vmem:[#allocation2 + $0x80] sm:$0xff]
      %v201 = vld [vmem:[#allocation2 + $0x88] sm:$0xff]
      %v202 = vld [vmem:[#allocation2 + $0x90] sm:$0xff]
      %v203 = vld [vmem:[#allocation2 + $0x98] sm:$0xff]
      %v204 = vld [vmem:[#allocation2 + $0xa0] sm:$0xff]
      %v205 = vld [vmem:[#allocation2 + $0xa8] sm:$0xff]
      %v206 = vld [vmem:[#allocation2 + $0xb0] sm:$0xff]
      %v207 = vld [vmem:[#allocation2 + $0xb8] sm:$0xff]
      %v208 = vld [vmem:[#allocation2 + $0xc0] sm:$0xff]
      %v209 = vld [vmem:[#allocation2 + $0xc8] sm:$0xff]
      %v210 = vld [vmem:[#allocation2 + $0xd0] sm:$0xff]
      %v211 = vld [vmem:[#allocation2 + $0xd8] sm:$0xff]
      %v212 = vld [vmem:[#allocation2 + $0xe0] sm:$0xff]
      %v213 = vld [vmem:[#allocation2 + $0xe8] sm:$0xff]
      %v214 = vld [vmem:[#allocation2 + $0xf0] sm:$0xff]
      %v215 = vld [vmem:[#allocation2 + $0xf8] sm:$0xff]
      %v216 = vsel %vm148, %v184, 0.0
      %217 = vadd.xlane.f32.xlu0 %v216
      %v218 = vpop.xlane.xlu0 %217
      %v219 = vsel %vm148, %v185, 0.0
      %220 = vadd.xlane.f32.xlu0 %v219
      %v221 = vpop.xlane.xlu0 %220
      %v222 = vsel %vm148, %v186, 0.0
      %223 = vadd.xlane.f32.xlu0 %v222
      %v224 = vpop.xlane.xlu0 %223
      %v225 = vsel %vm148, %v187, 0.0
      %226 = vadd.xlane.f32.xlu0 %v225
      %v227 = vpop.xlane.xlu0 %226
      %v228 = vsel %vm148, %v188, 0.0
      %229 = vadd.xlane.f32.xlu0 %v228
      %v230 = vpop.xlane.xlu0 %229
      %v231 = vsel %vm148, %v189, 0.0
      %232 = vadd.xlane.f32.xlu0 %v231
      %v233 = vpop.xlane.xlu0 %232
      %v234 = vsel %vm148, %v190, 0.0
      %235 = vadd.xlane.f32.xlu0 %v234
      %v236 = vpop.xlane.xlu0 %235
      %v237 = vsel %vm148, %v191, 0.0
      %238 = vadd.xlane.f32.xlu0 %v237
      %v239 = vpop.xlane.xlu0 %238
      %v240 = vsel %vm148, %v192, 0.0
      %241 = vadd.xlane.f32.xlu0 %v240
      %v242 = vpop.xlane.xlu0 %241
      %v243 = vsel %vm148, %v193, 0.0
      %244 = vadd.xlane.f32.xlu0 %v243
      %v245 = vpop.xlane.xlu0 %244
      %v246 = vsel %vm148, %v194, 0.0
      %247 = vadd.xlane.f32.xlu0 %v246
      %v248 = vpop.xlane.xlu0 %247
      %v249 = vsel %vm148, %v195, 0.0
      %250 = vadd.xlane.f32.xlu0 %v249
      %v251 = vpop.xlane.xlu0 %250
      %v252 = vsel %vm148, %v196, 0.0
      %253 = vadd.xlane.f32.xlu0 %v252
      %v254 = vpop.xlane.xlu0 %253
      %v255 = vsel %vm148, %v197, 0.0
      %256 = vadd.xlane.f32.xlu0 %v255
      %v257 = vpop.xlane.xlu0 %256
      %v258 = vsel %vm148, %v198, 0.0
      %259 = vadd.xlane.f32.xlu0 %v258
      %v260 = vpop.xlane.xlu0 %259
      %v261 = vsel %vm148, %v199, 0.0
      %262 = vadd.xlane.f32.xlu0 %v261
      %v263 = vpop.xlane.xlu0 %262
      %v264 = vsel %vm148, %v200, 0.0
      %265 = vadd.xlane.f32.xlu0 %v264
      %v266 = vpop.xlane.xlu0 %265
      %v267 = vsel %vm148, %v201, 0.0
      %268 = vadd.xlane.f32.xlu0 %v267
      %v269 = vpop.xlane.xlu0 %268
      %v270 = vsel %vm148, %v202, 0.0
      %271 = vadd.xlane.f32.xlu0 %v270
      %v272 = vpop.xlane.xlu0 %271
      %v273 = vsel %vm148, %v203, 0.0
      %274 = vadd.xlane.f32.xlu0 %v273
      %v275 = vpop.xlane.xlu0 %274
      %v276 = vsel %vm148, %v204, 0.0
      %277 = vadd.xlane.f32.xlu0 %v276
      %v278 = vpop.xlane.xlu0 %277
      %v279 = vsel %vm148, %v205, 0.0
      %280 = vadd.xlane.f32.xlu0 %v279
      %v281 = vpop.xlane.xlu0 %280
      %v282 = vsel %vm148, %v206, 0.0
      %283 = vadd.xlane.f32.xlu0 %v282
      %v284 = vpop.xlane.xlu0 %283
      %v285 = vsel %vm148, %v207, 0.0
      %286 = vadd.xlane.f32.xlu0 %v285
      %v287 = vpop.xlane.xlu0 %286
      %v288 = vsel %vm148, %v208, 0.0
      %289 = vadd.xlane.f32.xlu0 %v288
      %v290 = vpop.xlane.xlu0 %289
      %v291 = vsel %vm148, %v209, 0.0
      %292 = vadd.xlane.f32.xlu0 %v291
      %v293 = vpop.xlane.xlu0 %292
      %v294 = vsel %vm148, %v210, 0.0
      %295 = vadd.xlane.f32.xlu0 %v294
      %v296 = vpop.xlane.xlu0 %295
      %v297 = vsel %vm148, %v211, 0.0
      %298 = vadd.xlane.f32.xlu0 %v297
      %v299 = vpop.xlane.xlu0 %298
      %v300 = vsel %vm148, %v212, 0.0
      %301 = vadd.xlane.f32.xlu0 %v300
      %v302 = vpop.xlane.xlu0 %301
      %v303 = vsel %vm148, %v213, 0.0
      %304 = vadd.xlane.f32.xlu0 %v303
      %v305 = vpop.xlane.xlu0 %304
      %v306 = vsel %vm148, %v214, 0.0
      %307 = vadd.xlane.f32.xlu0 %v306
      %v308 = vpop.xlane.xlu0 %307
      %v309 = vsel %vm148, %v215, 0.0
      %310 = vadd.xlane.f32.xlu0 %v309
      %v311 = vpop.xlane.xlu0 %310
      %v312 = vld [vmem:[%s1] sm:$0xff]
      %v313 = vld [vmem:[%s1 + $0x8] sm:$0xff]
      %v314 = vld [vmem:[%s1 + $0x10] sm:$0xff]
      %v315 = vld [vmem:[%s1 + $0x18] sm:$0xff]
      %v316 = vld [vmem:[%s1 + $0x20] sm:$0xff]
      %v317 = vld [vmem:[%s1 + $0x28] sm:$0xff]
      %v318 = vld [vmem:[%s1 + $0x30] sm:$0xff]
      %v319 = vld [vmem:[%s1 + $0x38] sm:$0xff]
      %v320 = vld [vmem:[%s1 + $0x40] sm:$0xff]
      %v321 = vld [vmem:[%s1 + $0x48] sm:$0xff]
      %v322 = vld [vmem:[%s1 + $0x50] sm:$0xff]
      %v323 = vld [vmem:[%s1 + $0x58] sm:$0xff]
      %v324 = vld [vmem:[%s1 + $0x60] sm:$0xff]
      %v325 = vld [vmem:[%s1 + $0x68] sm:$0xff]
      %v326 = vld [vmem:[%s1 + $0x70] sm:$0xff]
      %v327 = vld [vmem:[%s1 + $0x78] sm:$0xff]
      %v328 = vld [vmem:[%s2] sm:$0x1]
      %v330 = vlaneseq
      %v331 = vshrl.u32 %v330, 7
      %v332 = vsub.s32 0, %v331
      %v333 = vrot.slane %v328, %v332
      %v367 = vlaneseq
      %v368 = vand.u32 %v367, 127
      %v369 = vlaneseq
      %v370 = vshrl.u32 %v369, 7
      %v371 = vsub.s32 %v368, %v370
      %v372 = vrot.slane %v218, %v371
      %v373 = vadd.s32 %v368, 4294967288
      %v374 = vlaneseq
      %v375 = vshrl.u32 %v374, 7
      %v376 = vsub.s32 %v373, %v375
      %v377 = vrot.slane %v221, %v376
      %vm378 = vcmask 130112
      %v379 = vsel %vm378, %v377, %v372
      %v380 = vadd.s32 %v368, 4294967280
      %v381 = vlaneseq
      %v382 = vshrl.u32 %v381, 7
      %v383 = vsub.s32 %v380, %v382
      %v384 = vrot.slane %v224, %v383
      %vm385 = vcmask 195712
      %v386 = vsel %vm385, %v384, %v379
      %v387 = vadd.s32 %v368, 4294967272
      %v388 = vlaneseq
      %v389 = vshrl.u32 %v388, 7
      %v390 = vsub.s32 %v387, %v389
      %v391 = vrot.slane %v227, %v390
      %vm392 = vcmask 261312
      %v393 = vsel %vm392, %v391, %v386
      %v394 = vadd.s32 %v368, 4294967264
      %v395 = vlaneseq
      %v396 = vshrl.u32 %v395, 7
      %v397 = vsub.s32 %v394, %v396
      %v398 = vrot.slane %v230, %v397
      %vm399 = vcmask 326912
      %v400 = vsel %vm399, %v398, %v393
      %v401 = vadd.s32 %v368, 4294967256
      %v402 = vlaneseq
      %v403 = vshrl.u32 %v402, 7
      %v404 = vsub.s32 %v401, %v403
      %v405 = vrot.slane %v233, %v404
      %vm406 = vcmask 392512
      %v407 = vsel %vm406, %v405, %v400
      %v408 = vadd.s32 %v368, 4294967248
      %v409 = vlaneseq
      %v410 = vshrl.u32 %v409, 7
      %v411 = vsub.s32 %v408, %v410
      %v412 = vrot.slane %v236, %v411
      %vm413 = vcmask 458112
      %v414 = vsel %vm413, %v412, %v407
      %v415 = vadd.s32 %v368, 4294967240
      %v416 = vlaneseq
      %v417 = vshrl.u32 %v416, 7
      %v418 = vsub.s32 %v415, %v417
      %v419 = vrot.slane %v239, %v418
      %vm420 = vcmask 523712
      %v421 = vsel %vm420, %v419, %v414
      %v422 = vadd.s32 %v368, 4294967232
      %v423 = vlaneseq
      %v424 = vshrl.u32 %v423, 7
      %v425 = vsub.s32 %v422, %v424
      %v426 = vrot.slane %v242, %v425
      %vm427 = vcmask 589312
      %v428 = vsel %vm427, %v426, %v421
      %v429 = vadd.s32 %v368, 4294967224
      %v430 = vlaneseq
      %v431 = vshrl.u32 %v430, 7
      %v432 = vsub.s32 %v429, %v431
      %v433 = vrot.slane %v245, %v432
      %vm434 = vcmask 654912
      %v435 = vsel %vm434, %v433, %v428
      %v436 = vadd.s32 %v368, 4294967216
      %v437 = vlaneseq
      %v438 = vshrl.u32 %v437, 7
      %v439 = vsub.s32 %v436, %v438
      %v440 = vrot.slane %v248, %v439
      %vm441 = vcmask 720512
      %v442 = vsel %vm441, %v440, %v435
      %v443 = vadd.s32 %v368, 4294967208
      %v444 = vlaneseq
      %v445 = vshrl.u32 %v444, 7
      %v446 = vsub.s32 %v443, %v445
      %v447 = vrot.slane %v251, %v446
      %vm448 = vcmask 786112
      %v449 = vsel %vm448, %v447, %v442
      %v450 = vadd.s32 %v368, 4294967200
      %v451 = vlaneseq
      %v452 = vshrl.u32 %v451, 7
      %v453 = vsub.s32 %v450, %v452
      %v454 = vrot.slane %v254, %v453
      %vm455 = vcmask 851712
      %v456 = vsel %vm455, %v454, %v449
      %v457 = vadd.s32 %v368, 4294967192
      %v458 = vlaneseq
      %v459 = vshrl.u32 %v458, 7
      %v460 = vsub.s32 %v457, %v459
      %v461 = vrot.slane %v257, %v460
      %vm462 = vcmask 917312
      %v463 = vsel %vm462, %v461, %v456
      %v464 = vadd.s32 %v368, 4294967184
      %v465 = vlaneseq
      %v466 = vshrl.u32 %v465, 7
      %v467 = vsub.s32 %v464, %v466
      %v468 = vrot.slane %v260, %v467
      %vm469 = vcmask 982912
      %v470 = vsel %vm469, %v468, %v463
      %v471 = vadd.s32 %v368, 4294967176
      %v472 = vlaneseq
      %v473 = vshrl.u32 %v472, 7
      %v474 = vsub.s32 %v471, %v473
      %v475 = vrot.slane %v263, %v474
      %vm476 = vcmask 1048512
      %v477 = vsel %vm476, %v475, %v470
      %v478 = vlaneseq
      %v479 = vshrl.u32 %v478, 7
      %v480 = vsub.s32 %v368, %v479
      %v481 = vrot.slane %v266, %v480
      %v482 = vlaneseq
      %v483 = vshrl.u32 %v482, 7
      %v484 = vsub.s32 %v373, %v483
      %v485 = vrot.slane %v269, %v484
      %v486 = vsel %vm378, %v485, %v481
      %v487 = vlaneseq
      %v488 = vshrl.u32 %v487, 7
      %v489 = vsub.s32 %v380, %v488
      %v490 = vrot.slane %v272, %v489
      %v491 = vsel %vm385, %v490, %v486
      %v492 = vlaneseq
      %v493 = vshrl.u32 %v492, 7
      %v494 = vsub.s32 %v387, %v493
      %v495 = vrot.slane %v275, %v494
      %v496 = vsel %vm392, %v495, %v491
      %v497 = vlaneseq
      %v498 = vshrl.u32 %v497, 7
      %v499 = vsub.s32 %v394, %v498
      %v500 = vrot.slane %v278, %v499
      %v501 = vsel %vm399, %v500, %v496
      %v502 = vlaneseq
      %v503 = vshrl.u32 %v502, 7
      %v504 = vsub.s32 %v401, %v503
      %v505 = vrot.slane %v281, %v504
      %v506 = vsel %vm406, %v505, %v501
      %v507 = vlaneseq
      %v508 = vshrl.u32 %v507, 7
      %v509 = vsub.s32 %v408, %v508
      %v510 = vrot.slane %v284, %v509
      %v511 = vsel %vm413, %v510, %v506
      %v512 = vlaneseq
      %v513 = vshrl.u32 %v512, 7
      %v514 = vsub.s32 %v415, %v513
      %v515 = vrot.slane %v287, %v514
      %v516 = vsel %vm420, %v515, %v511
      %v517 = vlaneseq
      %v518 = vshrl.u32 %v517, 7
      %v519 = vsub.s32 %v422, %v518
      %v520 = vrot.slane %v290, %v519
      %v521 = vsel %vm427, %v520, %v516
      %v522 = vlaneseq
      %v523 = vshrl.u32 %v522, 7
      %v524 = vsub.s32 %v429, %v523
      %v525 = vrot.slane %v293, %v524
      %v526 = vsel %vm434, %v525, %v521
      %v527 = vlaneseq
      %v528 = vshrl.u32 %v527, 7
      %v529 = vsub.s32 %v436, %v528
      %v530 = vrot.slane %v296, %v529
      %v531 = vsel %vm441, %v530, %v526
      %v532 = vlaneseq
      %v533 = vshrl.u32 %v532, 7
      %v534 = vsub.s32 %v443, %v533
      %v535 = vrot.slane %v299, %v534
      %v536 = vsel %vm448, %v535, %v531
      %v537 = vlaneseq
      %v538 = vshrl.u32 %v537, 7
      %v539 = vsub.s32 %v450, %v538
      %v540 = vrot.slane %v302, %v539
      %v541 = vsel %vm455, %v540, %v536
      %v542 = vlaneseq
      %v543 = vshrl.u32 %v542, 7
      %v544 = vsub.s32 %v457, %v543
      %v545 = vrot.slane %v305, %v544
      %v546 = vsel %vm462, %v545, %v541
      %v547 = vlaneseq
      %v548 = vshrl.u32 %v547, 7
      %v549 = vsub.s32 %v464, %v548
      %v550 = vrot.slane %v308, %v549
      %v551 = vsel %vm469, %v550, %v546
      %v552 = vlaneseq
      %v553 = vshrl.u32 %v552, 7
      %v554 = vsub.s32 %v471, %v553
      %v555 = vrot.slane %v311, %v554
      %v556 = vsel %vm476, %v555, %v551
      %vm557 = vcmask 1041409
      %v558 = vsel %vm557, %v556, %v477
      %560 = vmatprep.subr.mxu0 0.0
      %561 = vmatpush1.msra.mxu0 %v312
      %562 = vmatprep.subr.mxu0 0.0
      %563 = vmatpush1.msra.mxu0 %v313
      %564 = vmatprep.subr.mxu0 0.0
      %565 = vmatpush1.msra.mxu0 %v314
      %566 = vmatprep.subr.mxu0 0.0
      %567 = vmatpush1.msra.mxu0 %v315
      %568 = vmatprep.subr.mxu0 0.0
      %569 = vmatpush1.msra.mxu0 %v316
      %570 = vmatprep.subr.mxu0 0.0
      %571 = vmatpush1.msra.mxu0 %v317
      %572 = vmatprep.subr.mxu0 0.0
      %573 = vmatpush1.msra.mxu0 %v318
      %574 = vmatprep.subr.mxu0 0.0
      %575 = vmatpush1.msra.mxu0 %v319
      %576 = vmatprep.subr.mxu0 0.0
      %577 = vmatpush1.msra.mxu0 %v320
      %578 = vmatprep.subr.mxu0 0.0
      %579 = vmatpush1.msra.mxu0 %v321
      %580 = vmatprep.subr.mxu0 0.0
      %581 = vmatpush1.msra.mxu0 %v322
      %582 = vmatprep.subr.mxu0 0.0
      %583 = vmatpush1.msra.mxu0 %v323
      %584 = vmatprep.subr.mxu0 0.0
      %585 = vmatpush1.msra.mxu0 %v324
      %586 = vmatprep.subr.mxu0 0.0
      %587 = vmatpush1.msra.mxu0 %v325
      %588 = vmatprep.subr.mxu0 0.0
      %589 = vmatpush1.msra.mxu0 %v326
      %590 = vmatprep.subr.mxu0 0.0
      %591 = vmatpush1.msra.mxu0 %v327
      %592 = vmatprep.subr.mxu0 0.0
      %593 = vmatpush1.msra.mxu0 0.0
      %594 = vmatprep.subr.mxu0 0.0
      %595 = vmatpush1.msra.mxu0 0.0
      %596 = vmatprep.subr.mxu0 0.0
      %597 = vmatpush1.msra.mxu0 0.0
      %598 = vmatprep.subr.mxu0 0.0
      %599 = vmatpush1.msra.mxu0 0.0
      %600 = vmatprep.subr.mxu0 0.0
      %601 = vmatpush1.msra.mxu0 0.0
      %602 = vmatprep.subr.mxu0 0.0
      %603 = vmatpush1.msra.mxu0 0.0
      %604 = vmatprep.subr.mxu0 0.0
      %605 = vmatpush1.msra.mxu0 0.0
      %606 = vmatprep.subr.mxu0 0.0
      %607 = vmatpush1.msra.mxu0 0.0
      %608 = vmatprep.subr.mxu0 0.0
      %609 = vmatpush1.msra.mxu0 0.0
      %610 = vmatprep.subr.mxu0 0.0
      %611 = vmatpush1.msra.mxu0 0.0
      %612 = vmatprep.subr.mxu0 0.0
      %613 = vmatpush1.msra.mxu0 0.0
      %614 = vmatprep.subr.mxu0 0.0
      %615 = vmatpush1.msra.mxu0 0.0
      %616 = vmatprep.subr.mxu0 0.0
      %617 = vmatpush1.msra.mxu0 0.0
      %618 = vmatprep.subr.mxu0 0.0
      %619 = vmatpush1.msra.mxu0 0.0
      %620 = vmatprep.subr.mxu0 0.0
      %621 = vmatpush1.msra.mxu0 0.0
      %622 = vmatprep.subr.mxu0 0.0
      %623 = vmatpush1.msra.mxu0 0.0
      %624 = vmatprep.mubr.f32.mxu0 0.0
      %625 = vmatmul.mubr.f32.gmra.mrb[0].mxu0 %v558
      %v626 = vpop.f32.mrb[0].mxu0
      %v627 = vadd.f32 %v333, %v626
      %v628 = vpop.f32.mrb[0].mxu0
      %629 = vdwg.mxu0
      %630 = vst [vmem:[#allocation3] sm:$0x3] %v627
    $region21: #{tpu_custom_call.1} parent=1 // pred_fallthru
      _
    // Predicated region
    $region22: #{tpu_custom_call.1} parent=1 // pred_check
      _
    $region23: #{tpu_custom_call.1} parent=1 // pred_check_branch
      %632 = sbr.rel (0) target = $region25
    $region24: #{tpu_custom_call.1} parent=1 // pred_region
      %s634 = ssub.s32 32, 32
      %635 = vsyncadd [#allocation4], %s634
      %s637 = sshll.u32 [#allocation3], 4
      %s638 = int_to_ptr.vmem [resolvable:$true] %s637
      %640 = dma.vmem_to_hbm [thread:$0]  %s638, 32, %s3, [#allocation4]
    $region25: #{tpu_custom_call.1} parent=1 // pred_fallthru
      _
    // Predicated region
    $region26: #{tpu_custom_call.1} parent=1 // pred_check
      _
    $region27: #{tpu_custom_call.1} parent=1 // pred_check_branch
      %642 = sbr.rel (0) target = $region29
    $region28: #{tpu_custom_call.1} parent=1 // pred_region
      %643 = dma.done [#allocation4], 32
    $region29: #{tpu_custom_call.1} parent=1 // pred_fallthru
      _
    %644 = vsyncpa [#allocation4], 1

</llo_original>
